<compile_context>
chip_gen: v7x
topology: tpu7x:2x2x1
jax: 0.10.0
libtpu: 0.0.40
codegen_flags: <defaults>
</compile_context>

<pallas_src>
import functools

import jax
import jax.numpy as jnp
from jax import lax
from jax.experimental import pallas as pl
from jax.experimental.pallas import tpu as pltpu

BN_EPS = 1e-5
LANE = 128


def _round_up(x, m):
    return (x + m - 1) // m * m


def block_kernel(x_ref, w_ref, b_ref, g_ref, be_ref, *rest,
                 keep_threshold: int, apply_dropout: bool):
    """One 128-wide feature tile: FC -> ReLU -> BatchNorm1d (batch stats) -> Dropout.

    x_ref : (B, IN)       bf16  (full batch resident -> exact batch statistics)
    w_ref : (N_TILE, IN)  bf16  (PyTorch (out, in) layout, contracted on dim 1)
    b_ref, g_ref, be_ref : (1, N_TILE) f32 (gamma/beta already pre-scaled by 1/keep)
    rest  : (bits_ref, o_ref) when dropout is enabled, else (o_ref,)
    """
    o_ref = rest[-1]

    # ---- FC: y = x @ W^T + b (MXU consumes W directly as the transposed operand) ----
    y = lax.dot_general(
        x_ref[...], w_ref[...],
        dimension_numbers=(((1,), (1,)), ((), ())),
        preferred_element_type=jnp.float32)               # (B, N_TILE) f32
    y = y + b_ref[...]

    # ---- ReLU (VPU) ----
    a = jnp.maximum(y, 0.0)

    # ---- BatchNorm1d, training mode: batch mean / biased batch variance ----
    mean = jnp.mean(a, axis=0, keepdims=True)              # (1, N_TILE)
    d = a - mean                                           # centered once, reused
    var = jnp.mean(d * d, axis=0, keepdims=True)
    scale = g_ref[...] * lax.rsqrt(var + BN_EPS)           # gamma (and 1/keep) folded in
    bn = d * scale + be_ref[...]

    # ---- Dropout: integer-threshold compare, rescale already folded into gamma/beta ----
    if apply_dropout:
        keep = rest[0][...] < jnp.uint32(keep_threshold)
        bn = jnp.where(keep, bn, 0.0)

    o_ref[...] = bn.astype(o_ref.dtype)


def block_forward(x, weight, bias, gamma, beta, *, dropout_p=0.5,
                  dropout_key=None, n_tile=LANE):
    """x: (B, in) f32. weight: (out, in) PyTorch layout. Returns (B, out) f32."""
    B, in_size = x.shape
    out_size = weight.shape[0]
    apply_dropout = dropout_p > 0.0
    keep_prob = 1.0 - dropout_p

    # Lane-dense feature axis: pad OUT up to a multiple of 128 with zeros.
    out_p = _round_up(out_size, LANE)
    n_tile = min(n_tile, out_p)
    assert out_p % n_tile == 0 and n_tile % LANE == 0
    pad = out_p - out_size

    w_p = jnp.pad(weight, ((0, pad), (0, 0))).astype(jnp.bfloat16)       # (out_p, in)
    b_p = jnp.pad(bias, (0, pad)).reshape(1, out_p).astype(jnp.float32)
    g = gamma
    be = beta
    if apply_dropout:                     # fold 1/keep_prob into the BN affine
        g = g / keep_prob
        be = be / keep_prob
    g_p = jnp.pad(g, (0, pad)).reshape(1, out_p).astype(jnp.float32)
    be_p = jnp.pad(be, (0, pad)).reshape(1, out_p).astype(jnp.float32)
    x_bf = x.astype(jnp.bfloat16)

    grid = (out_p // n_tile,)
    in_specs = [
        pl.BlockSpec((B, in_size), lambda j: (0, 0)),        # x (full batch resident)
        pl.BlockSpec((n_tile, in_size), lambda j: (j, 0)),   # weight tile (out, in)
        pl.BlockSpec((1, n_tile), lambda j: (0, j)),         # bias
        pl.BlockSpec((1, n_tile), lambda j: (0, j)),         # gamma (pre-scaled)
        pl.BlockSpec((1, n_tile), lambda j: (0, j)),         # beta  (pre-scaled)
    ]
    args = [x_bf, w_p, b_p, g_p, be_p]

    keep_threshold = 0
    if apply_dropout:
        if dropout_key is None:
            dropout_key = jax.random.PRNGKey(0)
        bits = jax.random.bits(dropout_key, (B, out_p), dtype=jnp.uint32)
        in_specs.append(pl.BlockSpec((B, n_tile), lambda j: (0, j)))
        args.append(bits)
        keep_threshold = min(int(round(keep_prob * (2 ** 32))), 2 ** 32 - 1)

    kernel = functools.partial(block_kernel,
                               keep_threshold=keep_threshold,
                               apply_dropout=apply_dropout)

    out_padded = pl.pallas_call(
        kernel,
        out_shape=jax.ShapeDtypeStruct((B, out_p), jnp.float32),
        grid=grid,
        in_specs=in_specs,
        out_specs=pl.BlockSpec((B, n_tile), lambda j: (0, j)),
        compiler_params=pltpu.CompilerParams(
            dimension_semantics=("parallel",)),
    )(*args)

    return out_padded[:, :out_size]


def orthogonal_init(key, out_size, in_size):
    """Deterministic orthogonal init matching th.nn.init.orthogonal_ semantics."""
    a = jax.random.normal(key, (out_size, in_size), dtype=jnp.float32)
    flat = a if out_size >= in_size else a.T
    q, r = jnp.linalg.qr(flat)
    q = q * jnp.sign(jnp.diag(r))          # make the decomposition unique
    if out_size < in_size:
        q = q.T
    return q[:out_size, :in_size]


if __name__ == "__main__":
    # Block(in_size=32, out_size=64, orth_init=True, activation=ReLU,
    #       batch_norm=True, dropout=0.5)
    B, IN, OUT = 8, 32, 64
    DROPOUT_P = 0.5

    root = jax.random.PRNGKey(0)
    kx, kw, kd = jax.random.split(root, 3)

    x = jax.random.normal(kx, (B, IN), dtype=jnp.float32)
    weight = orthogonal_init(kw, OUT, IN)                 # fc.weight (out, in)
    bias = jnp.full((OUT,), 0.01, dtype=jnp.float32)      # fc.bias filled 0.01
    gamma = jnp.ones((OUT,), dtype=jnp.float32)           # BN weight default
    beta = jnp.zeros((OUT,), dtype=jnp.float32)           # BN bias default

    # Training-mode run with dropout.
    out = block_forward(x, weight, bias, gamma, beta,
                        dropout_p=DROPOUT_P, dropout_key=kd)
    out = jax.block_until_ready(out)
    assert out.shape == (B, OUT)
    assert bool(jnp.all(jnp.isfinite(out)))

    # Deterministic (no-dropout) run vs a pure-JAX reference using the same bf16
    # matmul operands as the kernel.
    det = jax.block_until_ready(
        block_forward(x, weight, bias, gamma, beta, dropout_p=0.0))
    y = jnp.dot(x.astype(jnp.bfloat16), weight.astype(jnp.bfloat16).T,
                preferred_element_type=jnp.float32) + bias
    a = jnp.maximum(y, 0.0)
    m = a.mean(axis=0, keepdims=True)
    v = ((a - m) ** 2).mean(axis=0, keepdims=True)
    ref = (a - m) * (gamma * jax.lax.rsqrt(v + BN_EPS)) + beta
    assert jnp.allclose(det, ref, atol=2e-3, rtol=2e-3), \
        float(jnp.max(jnp.abs(det - ref)))

    # Dropout run must equal 0 or ref / keep_prob, with the mask reconstructed from
    # the same uint32 bits / integer threshold the kernel used.
    keep_prob = 1.0 - DROPOUT_P
    bits_full = jax.random.bits(kd, (B, _round_up(OUT, LANE)), dtype=jnp.uint32)
    thr = min(int(round(keep_prob * (2 ** 32))), 2 ** 32 - 1)
    mask = bits_full[:, :OUT] < jnp.uint32(thr)
    ref_drop = jnp.where(mask, ref / keep_prob, 0.0)
    assert jnp.allclose(out, ref_drop, atol=5e-3, rtol=5e-3), \
        float(jnp.max(jnp.abs(out - ref_drop)))

    print("KERNEL_OK")
</pallas_src>

<mosaic_0001>
module attributes {stable_mosaic.version = 11 : i64} {
  func.func @block_kernel(%arg0: i32, %arg1: memref<8x32xbf16, #tpu.memory_space<vmem>>, %arg2: memref<128x32xbf16, #tpu.memory_space<vmem>>, %arg3: memref<1x128xf32, #tpu.memory_space<vmem>>, %arg4: memref<1x128xf32, #tpu.memory_space<vmem>>, %arg5: memref<1x128xf32, #tpu.memory_space<vmem>>, %arg6: memref<8x128xi32, #tpu.memory_space<vmem>>, %arg7: memref<8x128xf32, #tpu.memory_space<vmem>>) attributes {dimension_semantics = [#tpu.dimension_semantics<parallel>], iteration_bounds = array<i64: 1>, scalar_prefetch = 0 : i64, scratch_operands = 0 : i64, tpu.core_type = #tpu.core_type<tc>, window_params = [{pipeline_mode = #tpu.pipeline_mode<synchronous>, transform_indices = @transform_0, window_bounds = array<i64: 8, 32>}, {transform_indices = @transform_1, window_bounds = array<i64: 128, 32>}, {transform_indices = @transform_2, window_bounds = array<i64: 1, 128>}, {transform_indices = @transform_3, window_bounds = array<i64: 1, 128>}, {transform_indices = @transform_4, window_bounds = array<i64: 1, 128>}, {transform_indices = @transform_5, window_bounds = array<i64: 8, 128>}, {transform_indices = @transform_6, window_bounds = array<i64: 8, 128>}]} {
    %c0 = arith.constant 0 : index
    %c0_0 = arith.constant 0 : index
    %0 = vector.load %arg1[%c0, %c0_0] : memref<8x32xbf16, #tpu.memory_space<vmem>>, vector<8x32xbf16>
    %c0_1 = arith.constant 0 : index
    %c0_2 = arith.constant 0 : index
    %1 = vector.load %arg2[%c0_1, %c0_2] : memref<128x32xbf16, #tpu.memory_space<vmem>>, vector<128x32xbf16>
    %cst = arith.constant dense<0.000000e+00> : vector<8x128xf32>
    %2 = tpu.matmul %0, %1, %cst {dimension_numbers = #tpu.dot_dimension_numbers<[1], [1], [0], [0], [0, 0, 1, 0], [], []>} : vector<8x32xbf16>, vector<128x32xbf16>, vector<8x128xf32> -> vector<8x128xf32>
    %c0_3 = arith.constant 0 : index
    %c0_4 = arith.constant 0 : index
    %3 = vector.load %arg3[%c0_3, %c0_4] : memref<1x128xf32, #tpu.memory_space<vmem>>, vector<1x128xf32>
    %4 = vector.broadcast %3 : vector<1x128xf32> to vector<8x128xf32>
    %5 = arith.addf %2, %4 : vector<8x128xf32>
    %cst_5 = arith.constant 0.000000e+00 : f32
    %6 = vector.broadcast %cst_5 : f32 to vector<8x128xf32>
    %7 = arith.maximumf %5, %6 : vector<8x128xf32>
    %cst_6 = arith.constant dense<0.000000e+00> : vector<128xf32>
    %8 = vector.multi_reduction <add>, %7, %cst_6 [0] : vector<8x128xf32> to vector<128xf32>
    %9 = vector.shape_cast %8 : vector<128xf32> to vector<1x128xf32>
    %cst_7 = arith.constant 8.000000e+00 : f32
    %10 = vector.broadcast %cst_7 : f32 to vector<1x128xf32>
    %11 = arith.divf %9, %10 : vector<1x128xf32>
    %12 = vector.broadcast %11 : vector<1x128xf32> to vector<8x128xf32>
    %13 = arith.subf %7, %12 : vector<8x128xf32>
    %14 = arith.mulf %13, %13 : vector<8x128xf32>
    %cst_8 = arith.constant dense<0.000000e+00> : vector<128xf32>
    %15 = vector.multi_reduction <add>, %14, %cst_8 [0] : vector<8x128xf32> to vector<128xf32>
    %16 = vector.shape_cast %15 : vector<128xf32> to vector<1x128xf32>
    %cst_9 = arith.constant 8.000000e+00 : f32
    %17 = vector.broadcast %cst_9 : f32 to vector<1x128xf32>
    %18 = arith.divf %16, %17 : vector<1x128xf32>
    %c0_10 = arith.constant 0 : index
    %c0_11 = arith.constant 0 : index
    %19 = vector.load %arg4[%c0_10, %c0_11] : memref<1x128xf32, #tpu.memory_space<vmem>>, vector<1x128xf32>
    %cst_12 = arith.constant 9.99999974E-6 : f32
    %20 = vector.broadcast %cst_12 : f32 to vector<1x128xf32>
    %21 = arith.addf %18, %20 : vector<1x128xf32>
    %22 = math.rsqrt %21 : vector<1x128xf32>
    %23 = arith.mulf %19, %22 : vector<1x128xf32>
    %24 = vector.broadcast %23 : vector<1x128xf32> to vector<8x128xf32>
    %25 = arith.mulf %13, %24 : vector<8x128xf32>
    %c0_13 = arith.constant 0 : index
    %c0_14 = arith.constant 0 : index
    %26 = vector.load %arg5[%c0_13, %c0_14] : memref<1x128xf32, #tpu.memory_space<vmem>>, vector<1x128xf32>
    %27 = vector.broadcast %26 : vector<1x128xf32> to vector<8x128xf32>
    %28 = arith.addf %25, %27 : vector<8x128xf32>
    %c0_15 = arith.constant 0 : index
    %c0_16 = arith.constant 0 : index
    %29 = vector.load %arg6[%c0_15, %c0_16] : memref<8x128xi32, #tpu.memory_space<vmem>>, vector<8x128xi32>
    %c-2147483648_i32 = arith.constant -2147483648 : i32
    %30 = vector.broadcast %c-2147483648_i32 : i32 to vector<8x128xi32>
    %31 = arith.cmpi ult, %29, %30 : vector<8x128xi32>
    %cst_17 = arith.constant 0.000000e+00 : f32
    %32 = vector.broadcast %cst_17 : f32 to vector<8x128xf32>
    %33 = arith.select %31, %28, %32 : vector<8x128xi1>, vector<8x128xf32>
    %c0_18 = arith.constant 0 : index
    %c0_19 = arith.constant 0 : index
    %34 = vector.load %arg7[%c0_18, %c0_19] : memref<8x128xf32, #tpu.memory_space<vmem>>, vector<8x128xf32>
    tpu.vector_store %arg7[%c0_18, %c0_19], %33 {strides = array<i32>} : memref<8x128xf32, #tpu.memory_space<vmem>>, vector<8x128xf32>,
    return
  }
  func.func @transform_0(%arg0: i32) -> (i32, i32) {
    %c0_i32 = arith.constant 0 : i32
    %c0_i32_0 = arith.constant 0 : i32
    %c0_i32_1 = arith.constant 0 : i32
    return %c0_i32, %c0_i32_0 : i32, i32
  }
  func.func @transform_1(%arg0: i32) -> (i32, i32) {
    %c0_i32 = arith.constant 0 : i32
    %c0_i32_0 = arith.constant 0 : i32
    return %arg0, %c0_i32 : i32, i32
  }
  func.func @transform_2(%arg0: i32) -> (i32, i32) {
    %c0_i32 = arith.constant 0 : i32
    %c0_i32_0 = arith.constant 0 : i32
    return %c0_i32, %arg0 : i32, i32
  }
  func.func @transform_3(%arg0: i32) -> (i32, i32) {
    %c0_i32 = arith.constant 0 : i32
    %c0_i32_0 = arith.constant 0 : i32
    return %c0_i32, %arg0 : i32, i32
  }
  func.func @transform_4(%arg0: i32) -> (i32, i32) {
    %c0_i32 = arith.constant 0 : i32
    %c0_i32_0 = arith.constant 0 : i32
    return %c0_i32, %arg0 : i32, i32
  }
  func.func @transform_5(%arg0: i32) -> (i32, i32) {
    %c0_i32 = arith.constant 0 : i32
    %c0_i32_0 = arith.constant 0 : i32
    return %c0_i32, %arg0 : i32, i32
  }
  func.func @transform_6(%arg0: i32) -> (i32, i32) {
    %c0_i32 = arith.constant 0 : i32
    %c0_i32_0 = arith.constant 0 : i32
    return %c0_i32, %arg0 : i32, i32
  }
}

</mosaic_0001>

<llo_original>
// kernel: tpu_custom_call.1
$region0: #{tpu_custom_call.1}
  #allocation0 [shape = 'u32[]', space=smem, size = 0x4, offset = 0x4, fixed_abs, tag = 'smem constant byte address 0x4 - core index']
  #allocation1 [shape = 'u32[144,128]{1,0:T(1,128)}', space=vmem, size = 0x12000, scoped, tag = 'internal scratch']
  %s0 = inlined_call_operand.vmem [shape: bf16[8,32], index: 0, kind: input, shape index: {}]
  %s1 = inlined_call_operand.vmem [shape: bf16[128,32], index: 1, kind: input, shape index: {}]
  %s2 = inlined_call_operand.vmem [shape: f32[1,128], index: 2, kind: input, shape index: {}]
  %s3 = inlined_call_operand.vmem [shape: f32[1,128], index: 3, kind: input, shape index: {}]
  %s4 = inlined_call_operand.vmem [shape: f32[1,128], index: 4, kind: input, shape index: {}]
  %s5 = inlined_call_operand.vmem [shape: u32[8,128], index: 5, kind: input, shape index: {}]
  %s6 = inlined_call_operand.hbm [shape: f32[8,128], index: 6, kind: output, shape index: {}]
  %s7 = sld [smem:[#allocation0]]
  $region34: #{tpu_custom_call.1} parent=0
    _
  %s9 = ssub.s32 1, %s7
  %s10 = scalar_select 0, %s9, %s7
  $region1: #{tpu_custom_call.1} parent=0
    #allocation2 [shape = 'u8[4096]{0}', space=vmem, size = 0x1000, scoped, tag = 'output window, operand 0, single buffered']
    #allocation3 [shape = 's32[1]{0}', space=sflag, size = 0x4, scoped, tag = 'scoped memory for tpu_custom_call.1']
    %11 = vsyncpa [#allocation3], 0
    // Predicated region
    $region2: #{tpu_custom_call.1} parent=1 // pred_check
      _
    $region3: #{tpu_custom_call.1} parent=1 // pred_check_branch
      %13 = sbr.rel (0) target = $region5
    $region4: #{tpu_custom_call.1} parent=1 // pred_region
      _
    $region5: #{tpu_custom_call.1} parent=1 // pred_fallthru
      _
    // Predicated region
    $region6: #{tpu_custom_call.1} parent=1 // pred_check
      _
    $region7: #{tpu_custom_call.1} parent=1 // pred_check_branch
      %15 = sbr.rel (0) target = $region9
    $region8: #{tpu_custom_call.1} parent=1 // pred_region
      _
    $region9: #{tpu_custom_call.1} parent=1 // pred_fallthru
      _
    // Predicated region
    $region10: #{tpu_custom_call.1} parent=1 // pred_check
      _
    $region11: #{tpu_custom_call.1} parent=1 // pred_check_branch
      %17 = sbr.rel (0) target = $region13
    $region12: #{tpu_custom_call.1} parent=1 // pred_region
      _
    $region13: #{tpu_custom_call.1} parent=1 // pred_fallthru
      _
    // Predicated region
    $region14: #{tpu_custom_call.1} parent=1 // pred_check
      _
    $region15: #{tpu_custom_call.1} parent=1 // pred_check_branch
      %19 = sbr.rel (0) target = $region17
    $region16: #{tpu_custom_call.1} parent=1 // pred_region
      _
    $region17: #{tpu_custom_call.1} parent=1 // pred_fallthru
      _
    // Predicated region
    $region18: #{tpu_custom_call.1} parent=1 // pred_check
      _
    $region19: #{tpu_custom_call.1} parent=1 // pred_check_branch
      %21 = sbr.rel (0) target = $region21
    $region20: #{tpu_custom_call.1} parent=1 // pred_region
      _
    $region21: #{tpu_custom_call.1} parent=1 // pred_fallthru
      _
    // Predicated region
    $region22: #{tpu_custom_call.1} parent=1 // pred_check
      _
    $region23: #{tpu_custom_call.1} parent=1 // pred_check_branch
      %23 = sbr.rel (0) target = $region25
    $region24: #{tpu_custom_call.1} parent=1 // pred_region
      _
    $region25: #{tpu_custom_call.1} parent=1 // pred_fallthru
      _
    %v25 = vld [vmem:[%s0] sm:$0xf]
    %v26 = vld [vmem:[%s1] sm:$0xf]
    %v27 = vld [vmem:[%s1 + $0x4] sm:$0xf]
    %v28 = vld [vmem:[%s1 + $0x8] sm:$0xf]
    %v29 = vld [vmem:[%s1 + $0xc] sm:$0xf]
    %v30 = vld [vmem:[%s1 + $0x10] sm:$0xf]
    %v31 = vld [vmem:[%s1 + $0x14] sm:$0xf]
    %v32 = vld [vmem:[%s1 + $0x18] sm:$0xf]
    %v33 = vld [vmem:[%s1 + $0x1c] sm:$0xf]
    %v34 = vld [vmem:[%s1 + $0x20] sm:$0xf]
    %v35 = vld [vmem:[%s1 + $0x24] sm:$0xf]
    %v36 = vld [vmem:[%s1 + $0x28] sm:$0xf]
    %v37 = vld [vmem:[%s1 + $0x2c] sm:$0xf]
    %v38 = vld [vmem:[%s1 + $0x30] sm:$0xf]
    %v39 = vld [vmem:[%s1 + $0x34] sm:$0xf]
    %v40 = vld [vmem:[%s1 + $0x38] sm:$0xf]
    %v41 = vld [vmem:[%s1 + $0x3c] sm:$0xf]
    %v42 = vld [vmem:[%s2] sm:$0x1]
    %v44 = vlaneseq
    %v45 = vshrl.u32 %v44, 7
    %v46 = vsub.s32 0, %v45
    %v47 = vrot.slane %v42, %v46
    %v65 = vunpack.c.l.b16 %v26
    %v66 = vunpack.c.l.b16 %v27
    %v67 = vunpack.c.l.b16 %v28
    %v68 = vunpack.c.l.b16 %v29
    %v69 = vunpack.c.l.b16 %v30
    %v70 = vunpack.c.l.b16 %v31
    %v71 = vunpack.c.l.b16 %v32
    %v72 = vunpack.c.l.b16 %v33
    %v73 = vunpack.c.l.b16 %v34
    %v74 = vunpack.c.l.b16 %v35
    %v75 = vunpack.c.l.b16 %v36
    %v76 = vunpack.c.l.b16 %v37
    %v77 = vunpack.c.l.b16 %v38
    %v78 = vunpack.c.l.b16 %v39
    %v79 = vunpack.c.l.b16 %v40
    %v80 = vunpack.c.l.b16 %v41
    %v81 = vpack.c.b16 %v66, %v65
    %v82 = vpack.c.b16 %v68, %v67
    %v83 = vpack.c.b16 %v70, %v69
    %v84 = vpack.c.b16 %v72, %v71
    %v85 = vpack.c.b16 %v74, %v73
    %v86 = vpack.c.b16 %v76, %v75
    %v87 = vpack.c.b16 %v78, %v77
    %v88 = vpack.c.b16 %v80, %v79
    %vm89 = vcmask 261120
    %v91 = vsel %vm89, %v25, 0
    %v94 = vsel %vm89, %v81, 0
    %v97 = vsel %vm89, %v82, 0
    %v100 = vsel %vm89, %v83, 0
    %v103 = vsel %vm89, %v84, 0
    %v106 = vsel %vm89, %v85, 0
    %v109 = vsel %vm89, %v86, 0
    %v112 = vsel %vm89, %v87, 0
    %v115 = vsel %vm89, %v88, 0
    %117 = vmatprep.subr.bf16.mxu0 0
    %118 = vmatpush1.bf16.xpose.msra.mxu0 %v94
    %119 = vmatprep.subr.bf16.mxu0 0
    %120 = vmatpush1.bf16.xpose.msra.mxu0 %v97
    %121 = vmatprep.subr.bf16.mxu0 0
    %122 = vmatpush1.bf16.xpose.msra.mxu0 %v100
    %123 = vmatprep.subr.bf16.mxu0 0
    %124 = vmatpush1.bf16.xpose.msra.mxu0 %v103
    %125 = vmatprep.subr.bf16.mxu0 0
    %126 = vmatpush1.bf16.xpose.msra.mxu0 %v106
    %127 = vmatprep.subr.bf16.mxu0 0
    %128 = vmatpush1.bf16.xpose.msra.mxu0 %v109
    %129 = vmatprep.subr.bf16.mxu0 0
    %130 = vmatpush1.bf16.xpose.msra.mxu0 %v112
    %131 = vmatprep.subr.bf16.mxu0 0
    %132 = vmatpush1.bf16.xpose.msra.mxu0 %v115
    %133 = vmatprep.subr.bf16.mxu0 0
    %134 = vmatpush1.bf16.xpose.msra.mxu0 0
    %135 = vmatprep.subr.bf16.mxu0 0
    %136 = vmatpush1.bf16.xpose.msra.mxu0 0
    %137 = vmatprep.subr.bf16.mxu0 0
    %138 = vmatpush1.bf16.xpose.msra.mxu0 0
    %139 = vmatprep.subr.bf16.mxu0 0
    %140 = vmatpush1.bf16.xpose.msra.mxu0 0
    %141 = vmatprep.subr.bf16.mxu0 0
    %142 = vmatpush1.bf16.xpose.msra.mxu0 0
    %143 = vmatprep.subr.bf16.mxu0 0
    %144 = vmatpush1.bf16.xpose.msra.mxu0 0
    %145 = vmatprep.subr.bf16.mxu0 0
    %146 = vmatpush1.bf16.xpose.msra.mxu0 0
    %147 = vmatprep.subr.bf16.mxu0 0
    %148 = vmatpush1.bf16.xpose.msra.mxu0 0
    %149 = vmatprep.mubr.bf16.mxu0 0
    %150 = vmatmul.mubr.bf16.gmra.mrb[0].mxu0 %v91
    %v151 = vpop.f32.mrb[0].mxu0
    %v152 = vadd.f32 %v47, %v151
    %v153 = vpop.f32.mrb[0].mxu0
    %v154 = vpop.f32.mrb[0].mxu0
    %v155 = vpop.f32.mrb[0].mxu0
    %156 = vdwg.mxu0
    %v157 = vmax.f32 %v152, 0.0
    %v158 = vrot.slane %v157, 4
    %v159 = vadd.f32 %v157, %v158
    %v160 = vrot.slane %v159, 2
    %v161 = vadd.f32 %v159, %v160
    %v162 = vrot.slane %v161, 1
    %v163 = vadd.f32 %v161, %v162
    %v164 = vrcp.pop 8.0
    %v165 = vmul.f32 %v163, %v164
    %v166 = vsub.f32 %v157, %v165
    %v167 = vmul.f32 %v166, %v166
    %v168 = vrot.slane %v167, 4
    %v169 = vadd.f32 %v167, %v168
    %v170 = vrot.slane %v169, 2
    %v171 = vadd.f32 %v169, %v170
    %v172 = vrot.slane %v171, 1
    %v173 = vadd.f32 %v171, %v172
    %v174 = vmul.f32 %v173, %v164
    %v175 = vld [vmem:[%s3] sm:$0x1]
    %v176 = vadd.f32 %v174, 1e-05
    %v177 = vrsqrt.pop %v176
    %v178 = vmul.f32 %v175, %v177
    %v180 = vlaneseq
    %v181 = vshrl.u32 %v180, 7
    %v182 = vsub.s32 0, %v181
    %v183 = vrot.slane %v178, %v182
    %v185 = vmul.f32 %v166, %v183
    %v186 = vld [vmem:[%s4] sm:$0x1]
    %v188 = vlaneseq
    %v189 = vshrl.u32 %v188, 7
    %v190 = vsub.s32 0, %v189
    %v191 = vrot.slane %v186, %v190
    %v193 = vadd.f32 %v185, %v191
    %v194 = vld [vmem:[%s5] sm:$0xff]
    %vm195 = vcmp.lt.u32.totalorder %v194, 2147483648
    %v196 = vsel %vm195, %v193, 0.0
    %197 = vst [vmem:[#allocation2] sm:$0xff] %v196
    // Predicated region
    $region26: #{tpu_custom_call.1} parent=1 // pred_check
      _
    $region27: #{tpu_custom_call.1} parent=1 // pred_check_branch
      %199 = sbr.rel (0) target = $region29
    $region28: #{tpu_custom_call.1} parent=1 // pred_region
      %s201 = ssub.s32 128, 128
      %202 = vsyncadd [#allocation3], %s201
      %s204 = sshll.u32 [#allocation2], 4
      %s205 = int_to_ptr.vmem [resolvable:$true] %s204
      %207 = dma.vmem_to_hbm [thread:$0]  %s205, 128, %s6, [#allocation3]
    $region29: #{tpu_custom_call.1} parent=1 // pred_fallthru
      _
    // Predicated region
    $region30: #{tpu_custom_call.1} parent=1 // pred_check
      _
    $region31: #{tpu_custom_call.1} parent=1 // pred_check_branch
      %209 = sbr.rel (0) target = $region33
    $region32: #{tpu_custom_call.1} parent=1 // pred_region
      %210 = dma.done [#allocation3], 128
    $region33: #{tpu_custom_call.1} parent=1 // pred_fallthru
      _
    %211 = vsyncpa [#allocation3], 1

</llo_original>
